<compile_context>
chip_gen: v6e
topology: v6e:2x2x1
jax: 0.10.0
libtpu: 0.0.40
codegen_flags: <defaults>
</compile_context>

<pallas_src>
import functools

import jax
import jax.numpy as jnp
from jax import lax
from jax.experimental import pallas as pl
from jax.experimental.pallas import tpu as pltpu


def _rnn_kernel(x_ref, wxT_ref, wT_ref, out_ref, *, nt, matmul_dtype):
    if nt <= 0:
        out_ref[...] = jnp.zeros_like(out_ref)
        return

    # Input projection, done once per batch tile.  Operands cast once
    # (no-op on the f32 path); accumulation stays in f32 on the MXU.
    x = x_ref[...].astype(matmul_dtype)
    wx = wxT_ref[...].astype(matmul_dtype)
    xw = jnp.dot(x, wx, preferred_element_type=jnp.float32)    # (tb, N) f32

    # Recurrent weight: loaded + cast exactly once, outside the unrolled loop.
    wT = wT_ref[...].astype(matmul_dtype)                       # (N, N)

    # First recurrence step is free: r0 = 0  =>  r1 = tanh(0 @ WT + xw) = tanh(xw).
    r = jnp.tanh(xw)

    def body(_, r_f32):
        pre = jnp.dot(r_f32.astype(matmul_dtype), wT,
                      preferred_element_type=jnp.float32) + xw
        return jnp.tanh(pre)

    # Static trip count -> fully unrolled; the LLO scheduler can hide each
    # step's MXU drain behind the previous step's tanh (EUP) and add (VPU).
    r = lax.fori_loop(0, nt - 1, body, r, unroll=True)

    out_ref[...] = r.astype(out_ref.dtype)


def rnn_forward(x, WxT, WT, Nt, *, matmul_dtype=jnp.bfloat16, batch_tile=256):
    """x: (B, Nx), WxT: (Nx, N), WT: (N, N) -> r: (B, N) float32."""
    B, Nx = x.shape
    N = WT.shape[0]
    assert WxT.shape == (Nx, N) and WT.shape == (N, N)
    Nt = int(Nt)

    # Sublane-aligned batch tile; pad B up so the grid divides evenly.
    tb = max(8, min(int(batch_tile), ((B + 7) // 8) * 8))
    B_pad = ((B + tb - 1) // tb) * tb
    x_p = jnp.pad(x, ((0, B_pad - B), (0, 0))) if B_pad != B else x
    grid = (B_pad // tb,)

    flops = 2.0 * B_pad * Nx * N + 2.0 * B_pad * N * N * max(Nt - 1, 0)
    cost = pl.CostEstimate(
        flops=int(flops),
        transcendentals=int(B_pad * N * max(Nt, 0)),
        bytes_accessed=int((B_pad * Nx + Nx * N + N * N + B_pad * N) * 4),
    )

    kernel = functools.partial(_rnn_kernel, nt=Nt, matmul_dtype=matmul_dtype)

    out = pl.pallas_call(
        kernel,
        out_shape=jax.ShapeDtypeStruct((B_pad, N), jnp.float32),
        grid=grid,
        in_specs=[
            pl.BlockSpec((tb, Nx), lambda i: (i, 0)),   # x: tiled over batch
            pl.BlockSpec((Nx, N), lambda i: (0, 0)),    # WxT: resident across grid
            pl.BlockSpec((N, N), lambda i: (0, 0)),     # WT: resident across grid
        ],
        out_specs=pl.BlockSpec((tb, N), lambda i: (i, 0)),
        compiler_params=pltpu.CompilerParams(
            dimension_semantics=("parallel",)),
        cost_estimate=cost,
    )(x_p, WxT, WT)

    return out[:B] if B_pad != B else out


def rnn_reference(x, WxT, WT, Nt):
    """Pure-JAX f32 reference mirroring the PyTorch forward."""
    xw = x @ WxT
    r = jnp.zeros((x.shape[0], WT.shape[0]), jnp.float32)
    for _ in range(Nt):
        r = jnp.tanh(r @ WT + xw)
    return r


def rnn_reference_mixed(x, WxT, WT, Nt, matmul_dtype):
    """Pure-JAX reference with the kernel's mixed-precision matmul scheme."""
    if Nt <= 0:
        return jnp.zeros((x.shape[0], WT.shape[0]), jnp.float32)
    xw = jnp.dot(x.astype(matmul_dtype), WxT.astype(matmul_dtype),
                 preferred_element_type=jnp.float32)
    wT = WT.astype(matmul_dtype)
    r = jnp.tanh(xw)
    for _ in range(Nt - 1):
        r = jnp.tanh(jnp.dot(r.astype(matmul_dtype), wT,
                             preferred_element_type=jnp.float32) + xw)
    return r


if __name__ == "__main__":
    # Module hyperparameters (small, consistent with the PyTorch __init__).
    N = 128      # recurrent units
    Nt = 8       # recurrence steps
    rho = 1.2    # spectral scaling
    Nx = 32      # input dimension
    B = 8        # batch

    key = jax.random.PRNGKey(0)
    k_wt, k_wx, k_x = jax.random.split(key, 3)

    # Deterministic parameter init matching the PyTorch shapes/scaling:
    #   WT  = rho * randn(N, N) / sqrt(N)
    #   WxT = randn(Nx, N) / sqrt(Nx)
    WT = (rho * jax.random.normal(k_wt, (N, N), jnp.float32)
          / jnp.sqrt(jnp.float32(N)))
    WxT = (jax.random.normal(k_wx, (Nx, N), jnp.float32)
           / jnp.sqrt(jnp.float32(Nx)))
    x = jax.random.normal(k_x, (B, Nx), jnp.float32)

    # Fast path: bf16 MXU operands, f32 accumulation.  Checked against a
    # numerics-matched JAX reference (same bf16 casts, f32 accumulate).
    out_fast = jax.block_until_ready(
        rnn_forward(x, WxT, WT, Nt, matmul_dtype=jnp.bfloat16))
    ref_fast = rnn_reference_mixed(x, WxT, WT, Nt, jnp.bfloat16)
    assert out_fast.shape == (B, N)
    assert jnp.allclose(out_fast, ref_fast, atol=2e-3, rtol=2e-3), \
        "bf16 kernel mismatch vs mixed-precision reference"

    # Exact-semantics path: f32 matmuls, matches the PyTorch/f32 reference tightly.
    out_f32 = jax.block_until_ready(
        rnn_forward(x, WxT, WT, Nt, matmul_dtype=jnp.float32))
    ref_f32 = rnn_reference(x, WxT, WT, Nt)
    assert out_f32.shape == (B, N)
    assert jnp.allclose(out_f32, ref_f32, atol=1e-5, rtol=1e-5), \
        "f32 kernel mismatch vs f32 reference"

    print("KERNEL_OK")
</pallas_src>

<mosaic_0001>
module attributes {stable_mosaic.version = 11 : i64} {
  func.func @_rnn_kernel(%arg0: i32, %arg1: memref<8x32xf32, #tpu.memory_space<vmem>>, %arg2: memref<32x128xf32, #tpu.memory_space<vmem>>, %arg3: memref<128x128xf32, #tpu.memory_space<vmem>>, %arg4: memref<8x128xf32, #tpu.memory_space<vmem>>) attributes {dimension_semantics = [#tpu.dimension_semantics<parallel>], iteration_bounds = array<i64: 1>, scalar_prefetch = 0 : i64, scratch_operands = 0 : i64, tpu.core_type = #tpu.core_type<tc>, window_params = [{transform_indices = @transform_0, window_bounds = array<i64: 8, 32>}, {pipeline_mode = #tpu.pipeline_mode<synchronous>, transform_indices = @transform_1, window_bounds = array<i64: 32, 128>}, {pipeline_mode = #tpu.pipeline_mode<synchronous>, transform_indices = @transform_2, window_bounds = array<i64: 128, 128>}, {transform_indices = @transform_3, window_bounds = array<i64: 8, 128>}]} {
    %c0 = arith.constant 0 : index
    %c0_0 = arith.constant 0 : index
    %0 = vector.load %arg1[%c0, %c0_0] : memref<8x32xf32, #tpu.memory_space<vmem>>, vector<8x32xf32>
    %1 = arith.truncf %0 : vector<8x32xf32> to vector<8x32xbf16>
    %c0_1 = arith.constant 0 : index
    %c0_2 = arith.constant 0 : index
    %2 = vector.load %arg2[%c0_1, %c0_2] : memref<32x128xf32, #tpu.memory_space<vmem>>, vector<32x128xf32>
    %3 = arith.truncf %2 : vector<32x128xf32> to vector<32x128xbf16>
    %cst = arith.constant dense<0.000000e+00> : vector<8x128xf32>
    %4 = tpu.matmul %1, %3, %cst {dimension_numbers = #tpu.dot_dimension_numbers<[1], [0], [0], [1], [0, 0, 1, 1], [], []>} : vector<8x32xbf16>, vector<32x128xbf16>, vector<8x128xf32> -> vector<8x128xf32>
    %c0_3 = arith.constant 0 : index
    %c0_4 = arith.constant 0 : index
    %5 = vector.load %arg3[%c0_3, %c0_4] : memref<128x128xf32, #tpu.memory_space<vmem>>, vector<128x128xf32>
    %6 = arith.truncf %5 : vector<128x128xf32> to vector<128x128xbf16>
    %7 = math.tanh %4 : vector<8x128xf32>
    %c0_i32 = arith.constant 0 : i32
    %8 = arith.truncf %7 : vector<8x128xf32> to vector<8x128xbf16>
    %cst_5 = arith.constant dense<0.000000e+00> : vector<8x128xf32>
    %9 = tpu.matmul %8, %6, %cst_5 {dimension_numbers = #tpu.dot_dimension_numbers<[1], [0], [0], [1], [0, 0, 1, 1], [], []>} : vector<8x128xbf16>, vector<128x128xbf16>, vector<8x128xf32> -> vector<8x128xf32>
    %10 = arith.addf %9, %4 : vector<8x128xf32>
    %11 = math.tanh %10 : vector<8x128xf32>
    %c1_i32 = arith.constant 1 : i32
    %12 = arith.truncf %11 : vector<8x128xf32> to vector<8x128xbf16>
    %cst_6 = arith.constant dense<0.000000e+00> : vector<8x128xf32>
    %13 = tpu.matmul %12, %6, %cst_6 {dimension_numbers = #tpu.dot_dimension_numbers<[1], [0], [0], [1], [0, 0, 1, 1], [], []>} : vector<8x128xbf16>, vector<128x128xbf16>, vector<8x128xf32> -> vector<8x128xf32>
    %14 = arith.addf %13, %4 : vector<8x128xf32>
    %15 = math.tanh %14 : vector<8x128xf32>
    %c2_i32 = arith.constant 2 : i32
    %16 = arith.truncf %15 : vector<8x128xf32> to vector<8x128xbf16>
    %cst_7 = arith.constant dense<0.000000e+00> : vector<8x128xf32>
    %17 = tpu.matmul %16, %6, %cst_7 {dimension_numbers = #tpu.dot_dimension_numbers<[1], [0], [0], [1], [0, 0, 1, 1], [], []>} : vector<8x128xbf16>, vector<128x128xbf16>, vector<8x128xf32> -> vector<8x128xf32>
    %18 = arith.addf %17, %4 : vector<8x128xf32>
    %19 = math.tanh %18 : vector<8x128xf32>
    %c3_i32 = arith.constant 3 : i32
    %20 = arith.truncf %19 : vector<8x128xf32> to vector<8x128xbf16>
    %cst_8 = arith.constant dense<0.000000e+00> : vector<8x128xf32>
    %21 = tpu.matmul %20, %6, %cst_8 {dimension_numbers = #tpu.dot_dimension_numbers<[1], [0], [0], [1], [0, 0, 1, 1], [], []>} : vector<8x128xbf16>, vector<128x128xbf16>, vector<8x128xf32> -> vector<8x128xf32>
    %22 = arith.addf %21, %4 : vector<8x128xf32>
    %23 = math.tanh %22 : vector<8x128xf32>
    %c4_i32 = arith.constant 4 : i32
    %24 = arith.truncf %23 : vector<8x128xf32> to vector<8x128xbf16>
    %cst_9 = arith.constant dense<0.000000e+00> : vector<8x128xf32>
    %25 = tpu.matmul %24, %6, %cst_9 {dimension_numbers = #tpu.dot_dimension_numbers<[1], [0], [0], [1], [0, 0, 1, 1], [], []>} : vector<8x128xbf16>, vector<128x128xbf16>, vector<8x128xf32> -> vector<8x128xf32>
    %26 = arith.addf %25, %4 : vector<8x128xf32>
    %27 = math.tanh %26 : vector<8x128xf32>
    %c5_i32 = arith.constant 5 : i32
    %28 = arith.truncf %27 : vector<8x128xf32> to vector<8x128xbf16>
    %cst_10 = arith.constant dense<0.000000e+00> : vector<8x128xf32>
    %29 = tpu.matmul %28, %6, %cst_10 {dimension_numbers = #tpu.dot_dimension_numbers<[1], [0], [0], [1], [0, 0, 1, 1], [], []>} : vector<8x128xbf16>, vector<128x128xbf16>, vector<8x128xf32> -> vector<8x128xf32>
    %30 = arith.addf %29, %4 : vector<8x128xf32>
    %31 = math.tanh %30 : vector<8x128xf32>
    %c6_i32 = arith.constant 6 : i32
    %32 = arith.truncf %31 : vector<8x128xf32> to vector<8x128xbf16>
    %cst_11 = arith.constant dense<0.000000e+00> : vector<8x128xf32>
    %33 = tpu.matmul %32, %6, %cst_11 {dimension_numbers = #tpu.dot_dimension_numbers<[1], [0], [0], [1], [0, 0, 1, 1], [], []>} : vector<8x128xbf16>, vector<128x128xbf16>, vector<8x128xf32> -> vector<8x128xf32>
    %34 = arith.addf %33, %4 : vector<8x128xf32>
    %35 = math.tanh %34 : vector<8x128xf32>
    %c0_12 = arith.constant 0 : index
    %c0_13 = arith.constant 0 : index
    %36 = vector.load %arg4[%c0_12, %c0_13] : memref<8x128xf32, #tpu.memory_space<vmem>>, vector<8x128xf32>
    tpu.vector_store %arg4[%c0_12, %c0_13], %35 {strides = array<i32>} : memref<8x128xf32, #tpu.memory_space<vmem>>, vector<8x128xf32>,
    return
  }
  func.func @transform_0(%arg0: i32) -> (i32, i32) {
    %c0_i32 = arith.constant 0 : i32
    %c0_i32_0 = arith.constant 0 : i32
    return %arg0, %c0_i32 : i32, i32
  }
  func.func @transform_1(%arg0: i32) -> (i32, i32) {
    %c0_i32 = arith.constant 0 : i32
    %c0_i32_0 = arith.constant 0 : i32
    %c0_i32_1 = arith.constant 0 : i32
    return %c0_i32, %c0_i32_0 : i32, i32
  }
  func.func @transform_2(%arg0: i32) -> (i32, i32) {
    %c0_i32 = arith.constant 0 : i32
    %c0_i32_0 = arith.constant 0 : i32
    %c0_i32_1 = arith.constant 0 : i32
    return %c0_i32, %c0_i32_0 : i32, i32
  }
  func.func @transform_3(%arg0: i32) -> (i32, i32) {
    %c0_i32 = arith.constant 0 : i32
    %c0_i32_0 = arith.constant 0 : i32
    return %arg0, %c0_i32 : i32, i32
  }
}

</mosaic_0001>

<llo_original>
// kernel: tpu_custom_call.1
$region0: #{tpu_custom_call.1}
  #allocation0 [shape = 'u32[]', space=smem, size = 0x4, offset = 0x4, fixed_abs, tag = 'smem constant byte address 0x4 - core index']
  #allocation1 [shape = 'u32[144,128]{1,0:T(1,128)}', space=vmem, size = 0x12000, scoped, tag = 'internal scratch']
  %s0 = inlined_call_operand.hbm [shape: f32[8,32], index: 0, kind: input, shape index: {}]
  %s1 = inlined_call_operand.hbm [shape: f32[32,128], index: 1, kind: input, shape index: {}]
  %s2 = inlined_call_operand.hbm [shape: f32[128,128], index: 2, kind: input, shape index: {}]
  %s3 = inlined_call_operand.hbm [shape: f32[8,128], index: 3, kind: output, shape index: {}]
  %s4 = sld [smem:[#allocation0]]
  $region34: #{tpu_custom_call.1} parent=0
    _
  %s6 = ssub.s32 1, %s4
  %s7 = scalar_select 0, %s6, %s4
  $region1: #{tpu_custom_call.1} parent=0
    #allocation2 [shape = 'u8[4096]{0}', space=vmem, size = 0x1000, scoped, tag = 'input window, operand 0, single buffered']
    #allocation3 [shape = 's32[1]{0}', space=sflag, size = 0x4, scoped, tag = 'scoped memory for tpu_custom_call.1']
    #allocation4 [shape = 's32[1]{0}', space=sflag, size = 0x4, scoped, tag = 'scoped memory for tpu_custom_call.1']
    #allocation5 [shape = 'u8[16384]{0}', space=vmem, size = 0x4000, scoped, tag = 'input window, operand 1, single buffered']
    #allocation6 [shape = 's32[1]{0}', space=sflag, size = 0x4, scoped, tag = 'scoped memory for tpu_custom_call.1']
    #allocation7 [shape = 'u8[65536]{0}', space=vmem, size = 0x10000, scoped, tag = 'input window, operand 2, single buffered']
    #allocation8 [shape = 'u8[4096]{0}', space=vmem, size = 0x1000, scoped, tag = 'output window, operand 0, single buffered']
    %8 = vsyncpa [#allocation3], 0
    %9 = vsyncpa [#allocation6], 0
    %10 = vsyncpa [#allocation4], 0
    // Predicated region
    $region2: #{tpu_custom_call.1} parent=1 // pred_check
      _
    $region3: #{tpu_custom_call.1} parent=1 // pred_check_branch
      %12 = sbr.rel (0) target = $region5
    $region4: #{tpu_custom_call.1} parent=1 // pred_region
      %s14 = ssub.s32 128, 128
      %15 = vsyncadd [#allocation3], %s14
      %s17 = sshll.u32 [#allocation2], 4
      %s18 = int_to_ptr.vmem [resolvable:$true] %s17
      %20 = dma.hbm_to_vmem [thread:$0]  %s0, 128, %s18, [#allocation3]
    $region5: #{tpu_custom_call.1} parent=1 // pred_fallthru
      _
    // Predicated region
    $region6: #{tpu_custom_call.1} parent=1 // pred_check
      _
    $region7: #{tpu_custom_call.1} parent=1 // pred_check_branch
      %22 = sbr.rel (0) target = $region9
    $region8: #{tpu_custom_call.1} parent=1 // pred_region
      %s24 = ssub.s32 512, 512
      %25 = vsyncadd [#allocation6], %s24
      %s26 = sshll.u32 [#allocation5], 4
      %s27 = int_to_ptr.vmem [resolvable:$true] %s26
      %32 = dma.hbm_to_vmem [thread:$0]  %s1, 512, %s27, [#allocation6], 128, 128, 8
    $region9: #{tpu_custom_call.1} parent=1 // pred_fallthru
      _
    // Predicated region
    $region10: #{tpu_custom_call.1} parent=1 // pred_check
      _
    $region11: #{tpu_custom_call.1} parent=1 // pred_check_branch
      %34 = sbr.rel (0) target = $region13
    $region12: #{tpu_custom_call.1} parent=1 // pred_region
      %s36 = ssub.s32 2048, 2048
      %37 = vsyncadd [#allocation6], %s36
      %s38 = sshll.u32 [#allocation7], 4
      %s39 = int_to_ptr.vmem [resolvable:$true] %s38
      %44 = dma.hbm_to_vmem [thread:$0]  %s2, 2048, %s39, [#allocation6], 128, 128, 8
    $region13: #{tpu_custom_call.1} parent=1 // pred_fallthru
      _
    // Predicated region
    $region14: #{tpu_custom_call.1} parent=1 // pred_check
      _
    $region15: #{tpu_custom_call.1} parent=1 // pred_check_branch
      %46 = sbr.rel (0) target = $region17
    $region16: #{tpu_custom_call.1} parent=1 // pred_region
      %47 = dma.done [#allocation3], 128
    $region17: #{tpu_custom_call.1} parent=1 // pred_fallthru
      _
    // Predicated region
    $region18: #{tpu_custom_call.1} parent=1 // pred_check
      _
    $region19: #{tpu_custom_call.1} parent=1 // pred_check_branch
      %49 = sbr.rel (0) target = $region21
    $region20: #{tpu_custom_call.1} parent=1 // pred_region
      %50 = dma.done [#allocation6], 512
    $region21: #{tpu_custom_call.1} parent=1 // pred_fallthru
      _
    // Predicated region
    $region22: #{tpu_custom_call.1} parent=1 // pred_check
      _
    $region23: #{tpu_custom_call.1} parent=1 // pred_check_branch
      %52 = sbr.rel (0) target = $region25
    $region24: #{tpu_custom_call.1} parent=1 // pred_region
      %53 = dma.done [#allocation6], 2048
    $region25: #{tpu_custom_call.1} parent=1 // pred_fallthru
      _
    %v55 = vld [vmem:[#allocation2] sm:$0xff]
    %v56 = vpack.c.bf16 %v55, %v55
    %v57 = vld [vmem:[#allocation5] sm:$0xff]
    %v58 = vld [vmem:[#allocation5 + $0x8] sm:$0xff]
    %v59 = vld [vmem:[#allocation5 + $0x10] sm:$0xff]
    %v60 = vld [vmem:[#allocation5 + $0x18] sm:$0xff]
    %v61 = vpack.c.bf16 %v58, %v57
    %v62 = vpack.c.bf16 %v60, %v59
    %vm63 = vcmask 261120
    %v65 = vsel %vm63, %v56, 0
    %67 = vmatprep.subr.bf16.mxu0 0
    %68 = vmatpush1.bf16.msra.mxu0 0
    %69 = vmatprep.subr.bf16.mxu0 0
    %70 = vmatpush1.bf16.msra.mxu0 0
    %71 = vmatprep.subr.bf16.mxu0 0
    %72 = vmatpush1.bf16.msra.mxu0 0
    %73 = vmatprep.subr.bf16.mxu0 0
    %74 = vmatpush1.bf16.msra.mxu0 0
    %75 = vmatprep.subr.bf16.mxu0 0
    %76 = vmatpush1.bf16.msra.mxu0 0
    %77 = vmatprep.subr.bf16.mxu0 0
    %78 = vmatpush1.bf16.msra.mxu0 0
    %79 = vmatprep.subr.bf16.mxu0 0
    %80 = vmatpush1.bf16.msra.mxu0 %v62
    %81 = vmatprep.subr.bf16.mxu0 0
    %82 = vmatpush1.bf16.msra.mxu0 %v61
    %83 = vmatprep.subr.bf16.mxu0 0
    %84 = vmatpush2.bf16.msra.mxu0 0
    %85 = vmatprep.subr.bf16.mxu0 0
    %86 = vmatpush2.bf16.msra.mxu0 0
    %87 = vmatprep.subr.bf16.mxu0 0
    %88 = vmatpush2.bf16.msra.mxu0 0
    %89 = vmatprep.subr.bf16.mxu0 0
    %90 = vmatpush2.bf16.msra.mxu0 0
    %91 = vmatprep.subr.bf16.mxu0 0
    %92 = vmatpush2.bf16.msra.mxu0 0
    %93 = vmatprep.subr.bf16.mxu0 0
    %94 = vmatpush2.bf16.msra.mxu0 0
    %95 = vmatprep.subr.bf16.mxu0 0
    %96 = vmatpush2.bf16.msra.mxu0 0
    %97 = vmatprep.subr.bf16.mxu0 0
    %98 = vmatpush2.bf16.msra.mxu0 0
    %99 = vmatprep.mubr.bf16.mxu0 0
    %100 = vmatmul.mubr.bf16.gmra.mxu0 %v65
    %v101 = vpop.f32.mrf.mxu0
    %v102 = vadd.f32 0.0, %v101
    %v103 = vpop.f32.mrf.mxu0
    %v104 = vpop.f32.mrf.mxu0
    %v105 = vpop.f32.mrf.mxu0
    %106 = vdwg.mxu0
    %v107 = vld [vmem:[#allocation7] sm:$0xff]
    %v108 = vld [vmem:[#allocation7 + $0x8] sm:$0xff]
    %v109 = vld [vmem:[#allocation7 + $0x10] sm:$0xff]
    %v110 = vld [vmem:[#allocation7 + $0x18] sm:$0xff]
    %v111 = vld [vmem:[#allocation7 + $0x20] sm:$0xff]
    %v112 = vld [vmem:[#allocation7 + $0x28] sm:$0xff]
    %v113 = vld [vmem:[#allocation7 + $0x30] sm:$0xff]
    %v114 = vld [vmem:[#allocation7 + $0x38] sm:$0xff]
    %v115 = vld [vmem:[#allocation7 + $0x40] sm:$0xff]
    %v116 = vld [vmem:[#allocation7 + $0x48] sm:$0xff]
    %v117 = vld [vmem:[#allocation7 + $0x50] sm:$0xff]
    %v118 = vld [vmem:[#allocation7 + $0x58] sm:$0xff]
    %v119 = vld [vmem:[#allocation7 + $0x60] sm:$0xff]
    %v120 = vld [vmem:[#allocation7 + $0x68] sm:$0xff]
    %v121 = vld [vmem:[#allocation7 + $0x70] sm:$0xff]
    %v122 = vld [vmem:[#allocation7 + $0x78] sm:$0xff]
    %v123 = vpack.c.bf16 %v108, %v107
    %v124 = vpack.c.bf16 %v110, %v109
    %v125 = vpack.c.bf16 %v112, %v111
    %v126 = vpack.c.bf16 %v114, %v113
    %v127 = vpack.c.bf16 %v116, %v115
    %v128 = vpack.c.bf16 %v118, %v117
    %v129 = vpack.c.bf16 %v120, %v119
    %v130 = vpack.c.bf16 %v122, %v121
    %v131 = vtanh.pop %v102
    %v132 = vpack.c.bf16 %v131, %v131
    %133 = vmatprep.subr.bf16.mxu0 0
    %134 = vmatpush1.bf16.msra.mxu0 %v130
    %135 = vmatprep.subr.bf16.mxu0 0
    %136 = vmatpush1.bf16.msra.mxu0 %v129
    %137 = vmatprep.subr.bf16.mxu0 0
    %138 = vmatpush1.bf16.msra.mxu0 %v128
    %139 = vmatprep.subr.bf16.mxu0 0
    %140 = vmatpush1.bf16.msra.mxu0 %v127
    %141 = vmatprep.subr.bf16.mxu0 0
    %142 = vmatpush1.bf16.msra.mxu0 %v126
    %143 = vmatprep.subr.bf16.mxu0 0
    %144 = vmatpush1.bf16.msra.mxu0 %v125
    %145 = vmatprep.subr.bf16.mxu0 0
    %146 = vmatpush1.bf16.msra.mxu0 %v124
    %147 = vmatprep.subr.bf16.mxu0 0
    %148 = vmatpush1.bf16.msra.mxu0 %v123
    %149 = vmatprep.subr.bf16.mxu0 0
    %150 = vmatpush2.bf16.msra.mxu0 0
    %151 = vmatprep.subr.bf16.mxu0 0
    %152 = vmatpush2.bf16.msra.mxu0 0
    %153 = vmatprep.subr.bf16.mxu0 0
    %154 = vmatpush2.bf16.msra.mxu0 0
    %155 = vmatprep.subr.bf16.mxu0 0
    %156 = vmatpush2.bf16.msra.mxu0 0
    %157 = vmatprep.subr.bf16.mxu0 0
    %158 = vmatpush2.bf16.msra.mxu0 0
    %159 = vmatprep.subr.bf16.mxu0 0
    %160 = vmatpush2.bf16.msra.mxu0 0
    %161 = vmatprep.subr.bf16.mxu0 0
    %162 = vmatpush2.bf16.msra.mxu0 0
    %163 = vmatprep.subr.bf16.mxu0 0
    %164 = vmatpush2.bf16.msra.mxu0 0
    %165 = vmatprep.mubr.bf16.mxu0 0
    %166 = vmatmul.mubr.bf16.gmra.mxu0 %v132
    %v167 = vpop.f32.mrf.mxu0
    %v168 = vadd.f32 %v102, %v167
    %v169 = vpop.f32.mrf.mxu0
    %v170 = vpop.f32.mrf.mxu0
    %v171 = vpop.f32.mrf.mxu0
    %172 = vdwg.mxu0
    %v173 = vtanh.pop %v168
    %v174 = vpack.c.bf16 %v173, %v173
    %175 = vmatprep.subr.bf16.mxu0 0
    %176 = vmatpush1.bf16.msra.mxu0 %v130
    %177 = vmatprep.subr.bf16.mxu0 0
    %178 = vmatpush1.bf16.msra.mxu0 %v129
    %179 = vmatprep.subr.bf16.mxu0 0
    %180 = vmatpush1.bf16.msra.mxu0 %v128
    %181 = vmatprep.subr.bf16.mxu0 0
    %182 = vmatpush1.bf16.msra.mxu0 %v127
    %183 = vmatprep.subr.bf16.mxu0 0
    %184 = vmatpush1.bf16.msra.mxu0 %v126
    %185 = vmatprep.subr.bf16.mxu0 0
    %186 = vmatpush1.bf16.msra.mxu0 %v125
    %187 = vmatprep.subr.bf16.mxu0 0
    %188 = vmatpush1.bf16.msra.mxu0 %v124
    %189 = vmatprep.subr.bf16.mxu0 0
    %190 = vmatpush1.bf16.msra.mxu0 %v123
    %191 = vmatprep.subr.bf16.mxu0 0
    %192 = vmatpush2.bf16.msra.mxu0 0
    %193 = vmatprep.subr.bf16.mxu0 0
    %194 = vmatpush2.bf16.msra.mxu0 0
    %195 = vmatprep.subr.bf16.mxu0 0
    %196 = vmatpush2.bf16.msra.mxu0 0
    %197 = vmatprep.subr.bf16.mxu0 0
    %198 = vmatpush2.bf16.msra.mxu0 0
    %199 = vmatprep.subr.bf16.mxu0 0
    %200 = vmatpush2.bf16.msra.mxu0 0
    %201 = vmatprep.subr.bf16.mxu0 0
    %202 = vmatpush2.bf16.msra.mxu0 0
    %203 = vmatprep.subr.bf16.mxu0 0
    %204 = vmatpush2.bf16.msra.mxu0 0
    %205 = vmatprep.subr.bf16.mxu0 0
    %206 = vmatpush2.bf16.msra.mxu0 0
    %207 = vmatprep.mubr.bf16.mxu0 0
    %208 = vmatmul.mubr.bf16.gmra.mxu0 %v174
    %v209 = vpop.f32.mrf.mxu0
    %v210 = vadd.f32 %v102, %v209
    %v211 = vpop.f32.mrf.mxu0
    %v212 = vpop.f32.mrf.mxu0
    %v213 = vpop.f32.mrf.mxu0
    %214 = vdwg.mxu0
    %v215 = vtanh.pop %v210
    %v216 = vpack.c.bf16 %v215, %v215
    %217 = vmatprep.subr.bf16.mxu0 0
    %218 = vmatpush1.bf16.msra.mxu0 %v130
    %219 = vmatprep.subr.bf16.mxu0 0
    %220 = vmatpush1.bf16.msra.mxu0 %v129
    %221 = vmatprep.subr.bf16.mxu0 0
    %222 = vmatpush1.bf16.msra.mxu0 %v128
    %223 = vmatprep.subr.bf16.mxu0 0
    %224 = vmatpush1.bf16.msra.mxu0 %v127
    %225 = vmatprep.subr.bf16.mxu0 0
    %226 = vmatpush1.bf16.msra.mxu0 %v126
    %227 = vmatprep.subr.bf16.mxu0 0
    %228 = vmatpush1.bf16.msra.mxu0 %v125
    %229 = vmatprep.subr.bf16.mxu0 0
    %230 = vmatpush1.bf16.msra.mxu0 %v124
    %231 = vmatprep.subr.bf16.mxu0 0
    %232 = vmatpush1.bf16.msra.mxu0 %v123
    %233 = vmatprep.subr.bf16.mxu0 0
    %234 = vmatpush2.bf16.msra.mxu0 0
    %235 = vmatprep.subr.bf16.mxu0 0
    %236 = vmatpush2.bf16.msra.mxu0 0
    %237 = vmatprep.subr.bf16.mxu0 0
    %238 = vmatpush2.bf16.msra.mxu0 0
    %239 = vmatprep.subr.bf16.mxu0 0
    %240 = vmatpush2.bf16.msra.mxu0 0
    %241 = vmatprep.subr.bf16.mxu0 0
    %242 = vmatpush2.bf16.msra.mxu0 0
    %243 = vmatprep.subr.bf16.mxu0 0
    %244 = vmatpush2.bf16.msra.mxu0 0
    %245 = vmatprep.subr.bf16.mxu0 0
    %246 = vmatpush2.bf16.msra.mxu0 0
    %247 = vmatprep.subr.bf16.mxu0 0
    %248 = vmatpush2.bf16.msra.mxu0 0
    %249 = vmatprep.mubr.bf16.mxu0 0
    %250 = vmatmul.mubr.bf16.gmra.mxu0 %v216
    %v251 = vpop.f32.mrf.mxu0
    %v252 = vadd.f32 %v102, %v251
    %v253 = vpop.f32.mrf.mxu0
    %v254 = vpop.f32.mrf.mxu0
    %v255 = vpop.f32.mrf.mxu0
    %256 = vdwg.mxu0
    %v257 = vtanh.pop %v252
    %v258 = vpack.c.bf16 %v257, %v257
    %259 = vmatprep.subr.bf16.mxu0 0
    %260 = vmatpush1.bf16.msra.mxu0 %v130
    %261 = vmatprep.subr.bf16.mxu0 0
    %262 = vmatpush1.bf16.msra.mxu0 %v129
    %263 = vmatprep.subr.bf16.mxu0 0
    %264 = vmatpush1.bf16.msra.mxu0 %v128
    %265 = vmatprep.subr.bf16.mxu0 0
    %266 = vmatpush1.bf16.msra.mxu0 %v127
    %267 = vmatprep.subr.bf16.mxu0 0
    %268 = vmatpush1.bf16.msra.mxu0 %v126
    %269 = vmatprep.subr.bf16.mxu0 0
    %270 = vmatpush1.bf16.msra.mxu0 %v125
    %271 = vmatprep.subr.bf16.mxu0 0
    %272 = vmatpush1.bf16.msra.mxu0 %v124
    %273 = vmatprep.subr.bf16.mxu0 0
    %274 = vmatpush1.bf16.msra.mxu0 %v123
    %275 = vmatprep.subr.bf16.mxu0 0
    %276 = vmatpush2.bf16.msra.mxu0 0
    %277 = vmatprep.subr.bf16.mxu0 0
    %278 = vmatpush2.bf16.msra.mxu0 0
    %279 = vmatprep.subr.bf16.mxu0 0
    %280 = vmatpush2.bf16.msra.mxu0 0
    %281 = vmatprep.subr.bf16.mxu0 0
    %282 = vmatpush2.bf16.msra.mxu0 0
    %283 = vmatprep.subr.bf16.mxu0 0
    %284 = vmatpush2.bf16.msra.mxu0 0
    %285 = vmatprep.subr.bf16.mxu0 0
    %286 = vmatpush2.bf16.msra.mxu0 0
    %287 = vmatprep.subr.bf16.mxu0 0
    %288 = vmatpush2.bf16.msra.mxu0 0
    %289 = vmatprep.subr.bf16.mxu0 0
    %290 = vmatpush2.bf16.msra.mxu0 0
    %291 = vmatprep.mubr.bf16.mxu0 0
    %292 = vmatmul.mubr.bf16.gmra.mxu0 %v258
    %v293 = vpop.f32.mrf.mxu0
    %v294 = vadd.f32 %v102, %v293
    %v295 = vpop.f32.mrf.mxu0
    %v296 = vpop.f32.mrf.mxu0
    %v297 = vpop.f32.mrf.mxu0
    %298 = vdwg.mxu0
    %v299 = vtanh.pop %v294
    %v300 = vpack.c.bf16 %v299, %v299
    %301 = vmatprep.subr.bf16.mxu0 0
    %302 = vmatpush1.bf16.msra.mxu0 %v130
    %303 = vmatprep.subr.bf16.mxu0 0
    %304 = vmatpush1.bf16.msra.mxu0 %v129
    %305 = vmatprep.subr.bf16.mxu0 0
    %306 = vmatpush1.bf16.msra.mxu0 %v128
    %307 = vmatprep.subr.bf16.mxu0 0
    %308 = vmatpush1.bf16.msra.mxu0 %v127
    %309 = vmatprep.subr.bf16.mxu0 0
    %310 = vmatpush1.bf16.msra.mxu0 %v126
    %311 = vmatprep.subr.bf16.mxu0 0
    %312 = vmatpush1.bf16.msra.mxu0 %v125
    %313 = vmatprep.subr.bf16.mxu0 0
    %314 = vmatpush1.bf16.msra.mxu0 %v124
    %315 = vmatprep.subr.bf16.mxu0 0
    %316 = vmatpush1.bf16.msra.mxu0 %v123
    %317 = vmatprep.subr.bf16.mxu0 0
    %318 = vmatpush2.bf16.msra.mxu0 0
    %319 = vmatprep.subr.bf16.mxu0 0
    %320 = vmatpush2.bf16.msra.mxu0 0
    %321 = vmatprep.subr.bf16.mxu0 0
    %322 = vmatpush2.bf16.msra.mxu0 0
    %323 = vmatprep.subr.bf16.mxu0 0
    %324 = vmatpush2.bf16.msra.mxu0 0
    %325 = vmatprep.subr.bf16.mxu0 0
    %326 = vmatpush2.bf16.msra.mxu0 0
    %327 = vmatprep.subr.bf16.mxu0 0
    %328 = vmatpush2.bf16.msra.mxu0 0
    %329 = vmatprep.subr.bf16.mxu0 0
    %330 = vmatpush2.bf16.msra.mxu0 0
    %331 = vmatprep.subr.bf16.mxu0 0
    %332 = vmatpush2.bf16.msra.mxu0 0
    %333 = vmatprep.mubr.bf16.mxu0 0
    %334 = vmatmul.mubr.bf16.gmra.mxu0 %v300
    %v335 = vpop.f32.mrf.mxu0
    %v336 = vadd.f32 %v102, %v335
    %v337 = vpop.f32.mrf.mxu0
    %v338 = vpop.f32.mrf.mxu0
    %v339 = vpop.f32.mrf.mxu0
    %340 = vdwg.mxu0
    %v341 = vtanh.pop %v336
    %v342 = vpack.c.bf16 %v341, %v341
    %343 = vmatprep.subr.bf16.mxu0 0
    %344 = vmatpush1.bf16.msra.mxu0 %v130
    %345 = vmatprep.subr.bf16.mxu0 0
    %346 = vmatpush1.bf16.msra.mxu0 %v129
    %347 = vmatprep.subr.bf16.mxu0 0
    %348 = vmatpush1.bf16.msra.mxu0 %v128
    %349 = vmatprep.subr.bf16.mxu0 0
    %350 = vmatpush1.bf16.msra.mxu0 %v127
    %351 = vmatprep.subr.bf16.mxu0 0
    %352 = vmatpush1.bf16.msra.mxu0 %v126
    %353 = vmatprep.subr.bf16.mxu0 0
    %354 = vmatpush1.bf16.msra.mxu0 %v125
    %355 = vmatprep.subr.bf16.mxu0 0
    %356 = vmatpush1.bf16.msra.mxu0 %v124
    %357 = vmatprep.subr.bf16.mxu0 0
    %358 = vmatpush1.bf16.msra.mxu0 %v123
    %359 = vmatprep.subr.bf16.mxu0 0
    %360 = vmatpush2.bf16.msra.mxu0 0
    %361 = vmatprep.subr.bf16.mxu0 0
    %362 = vmatpush2.bf16.msra.mxu0 0
    %363 = vmatprep.subr.bf16.mxu0 0
    %364 = vmatpush2.bf16.msra.mxu0 0
    %365 = vmatprep.subr.bf16.mxu0 0
    %366 = vmatpush2.bf16.msra.mxu0 0
    %367 = vmatprep.subr.bf16.mxu0 0
    %368 = vmatpush2.bf16.msra.mxu0 0
    %369 = vmatprep.subr.bf16.mxu0 0
    %370 = vmatpush2.bf16.msra.mxu0 0
    %371 = vmatprep.subr.bf16.mxu0 0
    %372 = vmatpush2.bf16.msra.mxu0 0
    %373 = vmatprep.subr.bf16.mxu0 0
    %374 = vmatpush2.bf16.msra.mxu0 0
    %375 = vmatprep.mubr.bf16.mxu0 0
    %376 = vmatmul.mubr.bf16.gmra.mxu0 %v342
    %v377 = vpop.f32.mrf.mxu0
    %v378 = vadd.f32 %v102, %v377
    %v379 = vpop.f32.mrf.mxu0
    %v380 = vpop.f32.mrf.mxu0
    %v381 = vpop.f32.mrf.mxu0
    %382 = vdwg.mxu0
    %v383 = vtanh.pop %v378
    %v384 = vpack.c.bf16 %v383, %v383
    %385 = vmatprep.subr.bf16.mxu0 0
    %386 = vmatpush1.bf16.msra.mxu0 %v130
    %387 = vmatprep.subr.bf16.mxu0 0
    %388 = vmatpush1.bf16.msra.mxu0 %v129
    %389 = vmatprep.subr.bf16.mxu0 0
    %390 = vmatpush1.bf16.msra.mxu0 %v128
    %391 = vmatprep.subr.bf16.mxu0 0
    %392 = vmatpush1.bf16.msra.mxu0 %v127
    %393 = vmatprep.subr.bf16.mxu0 0
    %394 = vmatpush1.bf16.msra.mxu0 %v126
    %395 = vmatprep.subr.bf16.mxu0 0
    %396 = vmatpush1.bf16.msra.mxu0 %v125
    %397 = vmatprep.subr.bf16.mxu0 0
    %398 = vmatpush1.bf16.msra.mxu0 %v124
    %399 = vmatprep.subr.bf16.mxu0 0
    %400 = vmatpush1.bf16.msra.mxu0 %v123
    %401 = vmatprep.subr.bf16.mxu0 0
    %402 = vmatpush2.bf16.msra.mxu0 0
    %403 = vmatprep.subr.bf16.mxu0 0
    %404 = vmatpush2.bf16.msra.mxu0 0
    %405 = vmatprep.subr.bf16.mxu0 0
    %406 = vmatpush2.bf16.msra.mxu0 0
    %407 = vmatprep.subr.bf16.mxu0 0
    %408 = vmatpush2.bf16.msra.mxu0 0
    %409 = vmatprep.subr.bf16.mxu0 0
    %410 = vmatpush2.bf16.msra.mxu0 0
    %411 = vmatprep.subr.bf16.mxu0 0
    %412 = vmatpush2.bf16.msra.mxu0 0
    %413 = vmatprep.subr.bf16.mxu0 0
    %414 = vmatpush2.bf16.msra.mxu0 0
    %415 = vmatprep.subr.bf16.mxu0 0
    %416 = vmatpush2.bf16.msra.mxu0 0
    %417 = vmatprep.mubr.bf16.mxu0 0
    %418 = vmatmul.mubr.bf16.gmra.mxu0 %v384
    %v419 = vpop.f32.mrf.mxu0
    %v420 = vadd.f32 %v102, %v419
    %v421 = vpop.f32.mrf.mxu0
    %v422 = vpop.f32.mrf.mxu0
    %v423 = vpop.f32.mrf.mxu0
    %424 = vdwg.mxu0
    %v425 = vtanh.pop %v420
    %426 = vst [vmem:[#allocation8] sm:$0xff] %v425
    // Predicated region
    $region26: #{tpu_custom_call.1} parent=1 // pred_check
      _
    $region27: #{tpu_custom_call.1} parent=1 // pred_check_branch
      %428 = sbr.rel (0) target = $region29
    $region28: #{tpu_custom_call.1} parent=1 // pred_region
      %s430 = ssub.s32 128, 128
      %431 = vsyncadd [#allocation4], %s430
      %s433 = sshll.u32 [#allocation8], 4
      %s434 = int_to_ptr.vmem [resolvable:$true] %s433
      %436 = dma.vmem_to_hbm [thread:$0]  %s434, 128, %s3, [#allocation4]
    $region29: #{tpu_custom_call.1} parent=1 // pred_fallthru
      _
    // Predicated region
    $region30: #{tpu_custom_call.1} parent=1 // pred_check
      _
    $region31: #{tpu_custom_call.1} parent=1 // pred_check_branch
      %438 = sbr.rel (0) target = $region33
    $region32: #{tpu_custom_call.1} parent=1 // pred_region
      %439 = dma.done [#allocation4], 128
    $region33: #{tpu_custom_call.1} parent=1 // pred_fallthru
      _
    %440 = vsyncpa [#allocation3], 1
    %441 = vsyncpa [#allocation6], 1
    %442 = vsyncpa [#allocation4], 1

</llo_original>
